<compile_context>
chip_gen: v7x
topology: tpu7x:2x2x1
jax: 0.10.0
libtpu: 0.0.40
codegen_flags: <defaults>
</compile_context>

<pallas_src>
import jax
import jax.numpy as jnp
from jax.experimental import pallas as pl
from jax.experimental.pallas import tpu as pltpu

FEATURE_SIZE = 1      # x width
CLASS_SIZE = 32       # c width
HIDDEN = 400          # logical hidden width (PyTorch fc1/fc3 out)
HPAD = 512            # hidden padded to a multiple of 128 (zero-filled)
LATENT = 64
SLAB = 2 * LATENT     # 128-lane slab used for c / eps / [mu|logvar]

MAX_BATCH_TILE = 512  # VMEM-safe on v5e/v6e/v7x with double buffering


def _round_up(n, m):
    return (n + m - 1) // m * m


def _elu(h):
    # PyTorch ELU(alpha=1): h if h > 0 else exp(h) - 1
    return jnp.where(h > 0, h, jnp.exp(jnp.minimum(h, 0.0)) - 1.0)


def cvae_kernel(
    x_ref, c_ref, eps_ref,
    w1x_ref, w1c_ref, b1_ref,
    w2_ref, b2_ref,
    w3_ref, b3_ref,
    w4_ref, b4_ref,
    recon_ref, ml_ref,
):
    x = x_ref[...]        # (TB, 1)
    c128 = c_ref[...]     # (TB, 128): c in lanes 64..95, zeros elsewhere
    epsc = eps_ref[...]   # (TB, 128): eps in lanes 0..63, zeros elsewhere

    # ---- encode: fc1(cat([x, c])) == x * w1x_row + c128 @ w1c_pad + b1 ----
    h1 = (
        x * w1x_ref[...]                                                # (TB,1)*(1,512)
        + jnp.dot(c128, w1c_ref[...], preferred_element_type=jnp.float32)
        + b1_ref[...]
    )
    h1 = _elu(h1)

    # ---- fused head: ml = [mu | logvar], one lane-dense (TB,128) output ----
    ml = jnp.dot(h1, w2_ref[...], preferred_element_type=jnp.float32) + b2_ref[...]
    ml_ref[...] = ml

    # ---- reparameterize + build decoder input in one 128-lane slab ----
    # 64-lane rotation: lanes 0..63 of the rolled slab hold logvar, so
    # exp(0.5*rolled) aligns std with mu's lanes.  (static jnp.roll; shift=64
    # on a 128-wide slab so direction is irrelevant.)
    std_aligned = jnp.exp(0.5 * jnp.roll(ml, LATENT, axis=1))
    lane = jax.lax.broadcasted_iota(jnp.int32, ml.shape, 1)
    # lanes 0..63: z = mu + eps*std ; lanes 64..95: c ; lanes 96..127: 0
    zc = jnp.where(lane < LATENT, ml + epsc * std_aligned, c128)

    # ---- decode: fc3(cat([z, c])) == zc @ w3_pad + b3 (single dot) ----
    h3 = jnp.dot(zc, w3_ref[...], preferred_element_type=jnp.float32) + b3_ref[...]
    h3 = _elu(h3)

    logit = jnp.dot(h3, w4_ref[...], preferred_element_type=jnp.float32) + b4_ref[...]
    recon_ref[...] = 1.0 / (1.0 + jnp.exp(-logit))


def cvae_forward(x, c, eps, packed, *, max_batch_tile=MAX_BATCH_TILE):
    bs = x.shape[0]
    tb = min(max_batch_tile, _round_up(bs, 8))
    padded_bs = _round_up(bs, tb)
    grid = (padded_bs // tb,)
    f32 = jnp.float32

    # Lane-dense 128-wide slabs for the per-sample inputs (layout plumbing).
    xp = jnp.zeros((padded_bs, FEATURE_SIZE), f32).at[:bs].set(x.astype(f32))
    c128 = jnp.zeros((padded_bs, SLAB), f32).at[
        :bs, LATENT:LATENT + CLASS_SIZE].set(c.astype(f32))
    epsc = jnp.zeros((padded_bs, SLAB), f32).at[:bs, :LATENT].set(eps.astype(f32))

    def batch_spec(width):
        return pl.BlockSpec((tb, width), lambda i: (i, 0))

    def whole_spec(shape):
        return pl.BlockSpec(shape, lambda i: (0, 0))

    in_specs = [
        batch_spec(FEATURE_SIZE),       # x
        batch_spec(SLAB),               # c128
        batch_spec(SLAB),               # epsc
        whole_spec((1, HPAD)),          # w1x
        whole_spec((SLAB, HPAD)),       # w1c_pad
        whole_spec((1, HPAD)),          # b1
        whole_spec((HPAD, SLAB)),       # w2 = [w21 | w22]
        whole_spec((1, SLAB)),          # b2
        whole_spec((SLAB, HPAD)),       # w3_pad
        whole_spec((1, HPAD)),          # b3
        whole_spec((HPAD, 1)),          # w4
        whole_spec((1, 1)),             # b4
    ]
    out_specs = (
        batch_spec(FEATURE_SIZE),       # recon
        batch_spec(SLAB),               # ml = [mu | logvar]
    )
    out_shape = (
        jax.ShapeDtypeStruct((padded_bs, FEATURE_SIZE), f32),
        jax.ShapeDtypeStruct((padded_bs, SLAB), f32),
    )

    weights = (
        packed["w1x"], packed["w1c"], packed["b1"],
        packed["w2"], packed["b2"],
        packed["w3"], packed["b3"],
        packed["w4"], packed["b4"],
    )

    weight_bytes = sum(int(w.size) * 4 for w in weights)
    flops = 2 * padded_bs * (2 * HPAD + 3 * SLAB * HPAD)
    transcendentals = padded_bs * (2 * HPAD + SLAB + 2)
    bytes_accessed = (
        weight_bytes
        + padded_bs * (FEATURE_SIZE + 2 * SLAB) * 4      # activations in
        + padded_bs * (FEATURE_SIZE + SLAB) * 4          # activations out
    )

    recon_p, ml_p = pl.pallas_call(
        cvae_kernel,
        out_shape=out_shape,
        grid=grid,
        in_specs=in_specs,
        out_specs=out_specs,
        compiler_params=pltpu.CompilerParams(
            dimension_semantics=("parallel",)),
        cost_estimate=pl.CostEstimate(
            flops=flops,
            transcendentals=transcendentals,
            bytes_accessed=bytes_accessed),
    )(xp, c128, epsc, *weights)

    recon = recon_p[:bs]
    mu = ml_p[:bs, :LATENT]
    logvar = ml_p[:bs, LATENT:]
    return recon, mu, logvar


def init_params(key):
    """Deterministic synthetic params with PyTorch nn.Linear shapes
    (weights already transposed to (in_features, out_features))."""
    keys = jax.random.split(key, 10)

    def lin(kw, kb, fan_in, fan_out):
        bound = 1.0 / jnp.sqrt(fan_in)
        w = jax.random.uniform(kw, (fan_in, fan_out), jnp.float32, -bound, bound)
        b = jax.random.uniform(kb, (fan_out,), jnp.float32, -bound, bound)
        return w, b

    w1, b1 = lin(keys[0], keys[1], FEATURE_SIZE + CLASS_SIZE, HIDDEN)   # (33, 400)
    w21, b21 = lin(keys[2], keys[3], HIDDEN, LATENT)                    # (400, 64)
    w22, b22 = lin(keys[4], keys[5], HIDDEN, LATENT)                    # (400, 64)
    w3, b3 = lin(keys[6], keys[7], LATENT + CLASS_SIZE, HIDDEN)         # (96, 400)
    w4, b4 = lin(keys[8], keys[9], HIDDEN, 1)                           # (400, 1)
    return dict(w1=w1, b1=b1, w21=w21, b21=b21, w22=w22, b22=b22,
                w3=w3, b3=b3, w4=w4, b4=b4)


def pack_params(raw):
    """Pad HIDDEN 400->512 and pack weights into the lane-dense layouts the
    kernel consumes. All padding is exact zeros, so numerics are unchanged."""
    f32 = jnp.float32

    def pad_h_cols(w):   # (.., 400) -> (.., 512)
        return jnp.pad(w.astype(f32), ((0, 0), (0, HPAD - HIDDEN)))

    def pad_h_rows(w):   # (400, ..) -> (512, ..)
        return jnp.pad(w.astype(f32), ((0, HPAD - HIDDEN), (0, 0)))

    w1x = pad_h_cols(raw["w1"][:FEATURE_SIZE])                              # (1, 512)
    w1c = jnp.zeros((SLAB, HPAD), f32).at[
        LATENT:LATENT + CLASS_SIZE].set(pad_h_cols(raw["w1"][FEATURE_SIZE:]))  # (128, 512)
    b1 = pad_h_cols(raw["b1"].reshape(1, -1))                               # (1, 512)

    w2 = pad_h_rows(jnp.concatenate([raw["w21"], raw["w22"]], axis=1))      # (512, 128)
    b2 = jnp.concatenate([raw["b21"], raw["b22"]]).reshape(1, -1).astype(f32)

    w3 = jnp.zeros((SLAB, HPAD), f32).at[
        :LATENT + CLASS_SIZE].set(pad_h_cols(raw["w3"]))                    # (128, 512)
    b3 = pad_h_cols(raw["b3"].reshape(1, -1))                               # (1, 512)

    w4 = pad_h_rows(raw["w4"])                                              # (512, 1)
    b4 = raw["b4"].reshape(1, 1).astype(f32)                                # (1, 1)

    return dict(w1x=w1x, w1c=w1c, b1=b1, w2=w2, b2=b2, w3=w3, b3=b3,
                w4=w4, b4=b4)


def cvae_reference(x, c, eps, raw):
    """Pure-JAX reference matching the PyTorch forward (cat-based)."""
    inp = jnp.concatenate([x, c], axis=1)
    h1 = jax.nn.elu(inp @ raw["w1"] + raw["b1"])
    mu = h1 @ raw["w21"] + raw["b21"]
    logvar = h1 @ raw["w22"] + raw["b22"]
    z = mu + eps * jnp.exp(0.5 * logvar)
    h3 = jax.nn.elu(jnp.concatenate([z, c], axis=1) @ raw["w3"] + raw["b3"])
    recon = jax.nn.sigmoid(h3 @ raw["w4"] + raw["b4"])
    return recon, mu, logvar


if __name__ == "__main__":
    key = jax.random.PRNGKey(0)
    k_param, k_x, k_c, k_eps = jax.random.split(key, 4)

    bs = 8
    x = jax.random.normal(k_x, (bs, FEATURE_SIZE), jnp.float32)
    c = jax.random.normal(k_c, (bs, CLASS_SIZE), jnp.float32)
    # TODO(synk): torch.randn_like inside reparameterize is stateful RNG; eps is
    # sampled here (outside the kernel) and passed in, preserving the math.
    eps = jax.random.normal(k_eps, (bs, LATENT), jnp.float32)

    raw = init_params(k_param)
    packed = pack_params(raw)

    recon, mu, logvar = jax.block_until_ready(cvae_forward(x, c, eps, packed))

    ref_recon, ref_mu, ref_logvar = cvae_reference(x, c, eps, raw)
    assert recon.shape == (bs, FEATURE_SIZE)
    assert mu.shape == (bs, LATENT) and logvar.shape == (bs, LATENT)
    assert jnp.allclose(recon, ref_recon, atol=3e-5, rtol=1e-4)
    assert jnp.allclose(mu, ref_mu, atol=3e-5, rtol=1e-4)
    assert jnp.allclose(logvar, ref_logvar, atol=3e-5, rtol=1e-4)

    print("KERNEL_OK")
</pallas_src>

<mosaic_0001>
module attributes {stable_mosaic.version = 11 : i64} {
  func.func @cvae_kernel(%arg0: i32, %arg1: memref<8x1xf32, #tpu.memory_space<vmem>>, %arg2: memref<8x128xf32, #tpu.memory_space<vmem>>, %arg3: memref<8x128xf32, #tpu.memory_space<vmem>>, %arg4: memref<1x512xf32, #tpu.memory_space<vmem>>, %arg5: memref<128x512xf32, #tpu.memory_space<vmem>>, %arg6: memref<1x512xf32, #tpu.memory_space<vmem>>, %arg7: memref<512x128xf32, #tpu.memory_space<vmem>>, %arg8: memref<1x128xf32, #tpu.memory_space<vmem>>, %arg9: memref<128x512xf32, #tpu.memory_space<vmem>>, %arg10: memref<1x512xf32, #tpu.memory_space<vmem>>, %arg11: memref<512x1xf32, #tpu.memory_space<vmem>>, %arg12: memref<1x1xf32, #tpu.memory_space<vmem>>, %arg13: memref<8x1xf32, #tpu.memory_space<vmem>>, %arg14: memref<8x128xf32, #tpu.memory_space<vmem>>) attributes {dimension_semantics = [#tpu.dimension_semantics<parallel>], iteration_bounds = array<i64: 1>, scalar_prefetch = 0 : i64, scratch_operands = 0 : i64, tpu.core_type = #tpu.core_type<tc>, window_params = [{transform_indices = @transform_0, window_bounds = array<i64: 8, 1>}, {transform_indices = @transform_1, window_bounds = array<i64: 8, 128>}, {transform_indices = @transform_2, window_bounds = array<i64: 8, 128>}, {pipeline_mode = #tpu.pipeline_mode<synchronous>, transform_indices = @transform_3, window_bounds = array<i64: 1, 512>}, {pipeline_mode = #tpu.pipeline_mode<synchronous>, transform_indices = @transform_4, window_bounds = array<i64: 128, 512>}, {pipeline_mode = #tpu.pipeline_mode<synchronous>, transform_indices = @transform_5, window_bounds = array<i64: 1, 512>}, {pipeline_mode = #tpu.pipeline_mode<synchronous>, transform_indices = @transform_6, window_bounds = array<i64: 512, 128>}, {pipeline_mode = #tpu.pipeline_mode<synchronous>, transform_indices = @transform_7, window_bounds = array<i64: 1, 128>}, {pipeline_mode = #tpu.pipeline_mode<synchronous>, transform_indices = @transform_8, window_bounds = array<i64: 128, 512>}, {pipeline_mode = #tpu.pipeline_mode<synchronous>, transform_indices = @transform_9, window_bounds = array<i64: 1, 512>}, {pipeline_mode = #tpu.pipeline_mode<synchronous>, transform_indices = @transform_10, window_bounds = array<i64: 512, 1>}, {pipeline_mode = #tpu.pipeline_mode<synchronous>, transform_indices = @transform_11, window_bounds = array<i64: 1, 1>}, {transform_indices = @transform_12, window_bounds = array<i64: 8, 1>}, {transform_indices = @transform_13, window_bounds = array<i64: 8, 128>}]} {
    %c0 = arith.constant 0 : index
    %c0_0 = arith.constant 0 : index
    %0 = vector.load %arg1[%c0, %c0_0] : memref<8x1xf32, #tpu.memory_space<vmem>>, vector<8x1xf32>
    %c0_1 = arith.constant 0 : index
    %c0_2 = arith.constant 0 : index
    %1 = vector.load %arg2[%c0_1, %c0_2] : memref<8x128xf32, #tpu.memory_space<vmem>>, vector<8x128xf32>
    %c0_3 = arith.constant 0 : index
    %c0_4 = arith.constant 0 : index
    %2 = vector.load %arg3[%c0_3, %c0_4] : memref<8x128xf32, #tpu.memory_space<vmem>>, vector<8x128xf32>
    %c0_5 = arith.constant 0 : index
    %c0_6 = arith.constant 0 : index
    %3 = vector.load %arg4[%c0_5, %c0_6] : memref<1x512xf32, #tpu.memory_space<vmem>>, vector<1x512xf32>
    %4 = vector.broadcast %0 : vector<8x1xf32> to vector<8x512xf32>
    %5 = vector.broadcast %3 : vector<1x512xf32> to vector<8x512xf32>
    %6 = arith.mulf %4, %5 : vector<8x512xf32>
    %c0_7 = arith.constant 0 : index
    %c0_8 = arith.constant 0 : index
    %7 = vector.load %arg5[%c0_7, %c0_8] : memref<128x512xf32, #tpu.memory_space<vmem>>, vector<128x512xf32>
    %cst = arith.constant dense<0.000000e+00> : vector<8x512xf32>
    %8 = tpu.matmul %1, %7, %cst {dimension_numbers = #tpu.dot_dimension_numbers<[1], [0], [0], [1], [0, 0, 1, 1], [], []>} : vector<8x128xf32>, vector<128x512xf32>, vector<8x512xf32> -> vector<8x512xf32>
    %9 = arith.addf %6, %8 : vector<8x512xf32>
    %c0_9 = arith.constant 0 : index
    %c0_10 = arith.constant 0 : index
    %10 = vector.load %arg6[%c0_9, %c0_10] : memref<1x512xf32, #tpu.memory_space<vmem>>, vector<1x512xf32>
    %11 = vector.broadcast %10 : vector<1x512xf32> to vector<8x512xf32>
    %12 = arith.addf %9, %11 : vector<8x512xf32>
    %cst_11 = arith.constant 0.000000e+00 : f32
    %13 = vector.broadcast %cst_11 : f32 to vector<8x512xf32>
    %14 = arith.cmpf ogt, %12, %13 : vector<8x512xf32>
    %cst_12 = arith.constant 0.000000e+00 : f32
    %15 = vector.broadcast %cst_12 : f32 to vector<8x512xf32>
    %16 = arith.minimumf %12, %15 : vector<8x512xf32>
    %17 = math.exp %16 : vector<8x512xf32>
    %cst_13 = arith.constant 1.000000e+00 : f32
    %18 = vector.broadcast %cst_13 : f32 to vector<8x512xf32>
    %19 = arith.subf %17, %18 : vector<8x512xf32>
    %20 = arith.select %14, %12, %19 : vector<8x512xi1>, vector<8x512xf32>
    %c0_14 = arith.constant 0 : index
    %c0_15 = arith.constant 0 : index
    %21 = vector.load %arg7[%c0_14, %c0_15] : memref<512x128xf32, #tpu.memory_space<vmem>>, vector<512x128xf32>
    %cst_16 = arith.constant dense<0.000000e+00> : vector<8x128xf32>
    %22 = tpu.matmul %20, %21, %cst_16 {dimension_numbers = #tpu.dot_dimension_numbers<[1], [0], [0], [1], [0, 0, 1, 1], [], []>} : vector<8x512xf32>, vector<512x128xf32>, vector<8x128xf32> -> vector<8x128xf32>
    %c0_17 = arith.constant 0 : index
    %c0_18 = arith.constant 0 : index
    %23 = vector.load %arg8[%c0_17, %c0_18] : memref<1x128xf32, #tpu.memory_space<vmem>>, vector<1x128xf32>
    %24 = vector.broadcast %23 : vector<1x128xf32> to vector<8x128xf32>
    %25 = arith.addf %22, %24 : vector<8x128xf32>
    %c0_19 = arith.constant 0 : index
    %c0_20 = arith.constant 0 : index
    %26 = vector.load %arg14[%c0_19, %c0_20] : memref<8x128xf32, #tpu.memory_space<vmem>>, vector<8x128xf32>
    tpu.vector_store %arg14[%c0_19, %c0_20], %25 {strides = array<i32>} : memref<8x128xf32, #tpu.memory_space<vmem>>, vector<8x128xf32>,
    %27 = vector.extract_strided_slice %25 {offsets = [0, 64], sizes = [8, 64], strides = [1, 1]} : vector<8x128xf32> to vector<8x64xf32>
    %28 = vector.extract_strided_slice %25 {offsets = [0, 0], sizes = [8, 64], strides = [1, 1]} : vector<8x128xf32> to vector<8x64xf32>
    %29 = tpu.concatenate %27, %28 in 1 : vector<8x64xf32>, vector<8x64xf32> -> vector<8x128xf32>
    %cst_21 = arith.constant 5.000000e-01 : f32
    %30 = vector.broadcast %cst_21 : f32 to vector<8x128xf32>
    %31 = arith.mulf %30, %29 : vector<8x128xf32>
    %32 = math.exp %31 : vector<8x128xf32>
    %33 = tpu.iota {dimensions = array<i32: 1>} : vector<8x128xi32>
    %c64_i32 = arith.constant 64 : i32
    %34 = vector.broadcast %c64_i32 : i32 to vector<8x128xi32>
    %35 = arith.cmpi slt, %33, %34 : vector<8x128xi32>
    %36 = arith.mulf %2, %32 : vector<8x128xf32>
    %37 = arith.addf %25, %36 : vector<8x128xf32>
    %38 = arith.select %35, %37, %1 : vector<8x128xi1>, vector<8x128xf32>
    %c0_22 = arith.constant 0 : index
    %c0_23 = arith.constant 0 : index
    %39 = vector.load %arg9[%c0_22, %c0_23] : memref<128x512xf32, #tpu.memory_space<vmem>>, vector<128x512xf32>
    %cst_24 = arith.constant dense<0.000000e+00> : vector<8x512xf32>
    %40 = tpu.matmul %38, %39, %cst_24 {dimension_numbers = #tpu.dot_dimension_numbers<[1], [0], [0], [1], [0, 0, 1, 1], [], []>} : vector<8x128xf32>, vector<128x512xf32>, vector<8x512xf32> -> vector<8x512xf32>
    %c0_25 = arith.constant 0 : index
    %c0_26 = arith.constant 0 : index
    %41 = vector.load %arg10[%c0_25, %c0_26] : memref<1x512xf32, #tpu.memory_space<vmem>>, vector<1x512xf32>
    %42 = vector.broadcast %41 : vector<1x512xf32> to vector<8x512xf32>
    %43 = arith.addf %40, %42 : vector<8x512xf32>
    %cst_27 = arith.constant 0.000000e+00 : f32
    %44 = vector.broadcast %cst_27 : f32 to vector<8x512xf32>
    %45 = arith.cmpf ogt, %43, %44 : vector<8x512xf32>
    %cst_28 = arith.constant 0.000000e+00 : f32
    %46 = vector.broadcast %cst_28 : f32 to vector<8x512xf32>
    %47 = arith.minimumf %43, %46 : vector<8x512xf32>
    %48 = math.exp %47 : vector<8x512xf32>
    %cst_29 = arith.constant 1.000000e+00 : f32
    %49 = vector.broadcast %cst_29 : f32 to vector<8x512xf32>
    %50 = arith.subf %48, %49 : vector<8x512xf32>
    %51 = arith.select %45, %43, %50 : vector<8x512xi1>, vector<8x512xf32>
    %c0_30 = arith.constant 0 : index
    %c0_31 = arith.constant 0 : index
    %52 = vector.load %arg11[%c0_30, %c0_31] : memref<512x1xf32, #tpu.memory_space<vmem>>, vector<512x1xf32>
    %cst_32 = arith.constant dense<0.000000e+00> : vector<8x1xf32>
    %53 = tpu.matmul %51, %52, %cst_32 {dimension_numbers = #tpu.dot_dimension_numbers<[1], [0], [0], [1], [0, 0, 1, 1], [], []>} : vector<8x512xf32>, vector<512x1xf32>, vector<8x1xf32> -> vector<8x1xf32>
    %c0_33 = arith.constant 0 : index
    %c0_34 = arith.constant 0 : index
    %54 = vector.load %arg12[%c0_33, %c0_34] : memref<1x1xf32, #tpu.memory_space<vmem>>, vector<1x1xf32>
    %55 = vector.broadcast %54 : vector<1x1xf32> to vector<8x1xf32>
    %56 = arith.addf %53, %55 : vector<8x1xf32>
    %cst_35 = arith.constant 0.000000e+00 : f32
    %57 = vector.broadcast %cst_35 : f32 to vector<8x1xf32>
    %58 = arith.subf %57, %56 : vector<8x1xf32>
    %59 = math.exp %58 : vector<8x1xf32>
    %cst_36 = arith.constant 1.000000e+00 : f32
    %60 = vector.broadcast %cst_36 : f32 to vector<8x1xf32>
    %61 = arith.addf %60, %59 : vector<8x1xf32>
    %cst_37 = arith.constant 1.000000e+00 : f32
    %62 = vector.broadcast %cst_37 : f32 to vector<8x1xf32>
    %63 = arith.divf %62, %61 : vector<8x1xf32>
    %c0_38 = arith.constant 0 : index
    %c0_39 = arith.constant 0 : index
    %64 = vector.load %arg13[%c0_38, %c0_39] : memref<8x1xf32, #tpu.memory_space<vmem>>, vector<8x1xf32>
    tpu.vector_store %arg13[%c0_38, %c0_39], %63 {strides = array<i32>} : memref<8x1xf32, #tpu.memory_space<vmem>>, vector<8x1xf32>,
    return
  }
  func.func @transform_0(%arg0: i32) -> (i32, i32) {
    %c0_i32 = arith.constant 0 : i32
    %c0_i32_0 = arith.constant 0 : i32
    return %arg0, %c0_i32 : i32, i32
  }
  func.func @transform_1(%arg0: i32) -> (i32, i32) {
    %c0_i32 = arith.constant 0 : i32
    %c0_i32_0 = arith.constant 0 : i32
    return %arg0, %c0_i32 : i32, i32
  }
  func.func @transform_2(%arg0: i32) -> (i32, i32) {
    %c0_i32 = arith.constant 0 : i32
    %c0_i32_0 = arith.constant 0 : i32
    return %arg0, %c0_i32 : i32, i32
  }
  func.func @transform_3(%arg0: i32) -> (i32, i32) {
    %c0_i32 = arith.constant 0 : i32
    %c0_i32_0 = arith.constant 0 : i32
    %c0_i32_1 = arith.constant 0 : i32
    return %c0_i32, %c0_i32_0 : i32, i32
  }
  func.func @transform_4(%arg0: i32) -> (i32, i32) {
    %c0_i32 = arith.constant 0 : i32
    %c0_i32_0 = arith.constant 0 : i32
    %c0_i32_1 = arith.constant 0 : i32
    return %c0_i32, %c0_i32_0 : i32, i32
  }
  func.func @transform_5(%arg0: i32) -> (i32, i32) {
    %c0_i32 = arith.constant 0 : i32
    %c0_i32_0 = arith.constant 0 : i32
    %c0_i32_1 = arith.constant 0 : i32
    return %c0_i32, %c0_i32_0 : i32, i32
  }
  func.func @transform_6(%arg0: i32) -> (i32, i32) {
    %c0_i32 = arith.constant 0 : i32
    %c0_i32_0 = arith.constant 0 : i32
    %c0_i32_1 = arith.constant 0 : i32
    return %c0_i32, %c0_i32_0 : i32, i32
  }
  func.func @transform_7(%arg0: i32) -> (i32, i32) {
    %c0_i32 = arith.constant 0 : i32
    %c0_i32_0 = arith.constant 0 : i32
    %c0_i32_1 = arith.constant 0 : i32
    return %c0_i32, %c0_i32_0 : i32, i32
  }
  func.func @transform_8(%arg0: i32) -> (i32, i32) {
    %c0_i32 = arith.constant 0 : i32
    %c0_i32_0 = arith.constant 0 : i32
    %c0_i32_1 = arith.constant 0 : i32
    return %c0_i32, %c0_i32_0 : i32, i32
  }
  func.func @transform_9(%arg0: i32) -> (i32, i32) {
    %c0_i32 = arith.constant 0 : i32
    %c0_i32_0 = arith.constant 0 : i32
    %c0_i32_1 = arith.constant 0 : i32
    return %c0_i32, %c0_i32_0 : i32, i32
  }
  func.func @transform_10(%arg0: i32) -> (i32, i32) {
    %c0_i32 = arith.constant 0 : i32
    %c0_i32_0 = arith.constant 0 : i32
    %c0_i32_1 = arith.constant 0 : i32
    return %c0_i32, %c0_i32_0 : i32, i32
  }
  func.func @transform_11(%arg0: i32) -> (i32, i32) {
    %c0_i32 = arith.constant 0 : i32
    %c0_i32_0 = arith.constant 0 : i32
    %c0_i32_1 = arith.constant 0 : i32
    return %c0_i32, %c0_i32_0 : i32, i32
  }
  func.func @transform_12(%arg0: i32) -> (i32, i32) {
    %c0_i32 = arith.constant 0 : i32
    %c0_i32_0 = arith.constant 0 : i32
    return %arg0, %c0_i32 : i32, i32
  }
  func.func @transform_13(%arg0: i32) -> (i32, i32) {
    %c0_i32 = arith.constant 0 : i32
    %c0_i32_0 = arith.constant 0 : i32
    return %arg0, %c0_i32 : i32, i32
  }
}

</mosaic_0001>

<llo_original>
// kernel: tpu_custom_call.1
$region0: #{tpu_custom_call.1}
  #allocation0 [shape = 'u32[]', space=smem, size = 0x4, offset = 0x4, fixed_abs, tag = 'smem constant byte address 0x4 - core index']
  #allocation1 [shape = 'u32[144,128]{1,0:T(1,128)}', space=vmem, size = 0x12000, scoped, tag = 'internal scratch']
  #allocation2 [shape = 'f32[1,1]{1,0:T(1,128)S(1)}', space=vmem, size = 0x200, scoped, tag = 'scoped memory for tpu_custom_call.1']
  %s0 = inlined_call_operand.vmem [shape: f32[8,1], index: 0, kind: input, shape index: {}]
  %s1 = inlined_call_operand.vmem [shape: f32[8,128], index: 1, kind: input, shape index: {}]
  %s2 = inlined_call_operand.vmem [shape: f32[8,128], index: 2, kind: input, shape index: {}]
  %s3 = inlined_call_operand.vmem [shape: f32[1,512], index: 3, kind: input, shape index: {}]
  %s4 = inlined_call_operand.vmem [shape: f32[128,512], index: 4, kind: input, shape index: {}]
  %s5 = inlined_call_operand.vmem [shape: f32[1,512], index: 5, kind: input, shape index: {}]
  %s6 = inlined_call_operand.hbm [shape: f32[512,128], index: 6, kind: input, shape index: {}]
  %s7 = inlined_call_operand.vmem [shape: f32[1,128], index: 7, kind: input, shape index: {}]
  %s8 = inlined_call_operand.hbm [shape: f32[128,512], index: 8, kind: input, shape index: {}]
  %s9 = inlined_call_operand.vmem [shape: f32[1,512], index: 9, kind: input, shape index: {}]
  %s10 = inlined_call_operand.vmem [shape: f32[512,1], index: 10, kind: input, shape index: {}]
  %s11 = inlined_call_operand.<no memory space> [shape: f32[1,1], index: 11, kind: input, shape index: {}]
  %s12 = inlined_call_operand.vmem [shape: f32[8,1], index: 12, kind: output, shape index: {0}]
  %s13 = inlined_call_operand.hbm [shape: f32[8,128], index: 13, kind: output, shape index: {1}]
  %14 = xla_tuple %s12, %s13
  %s15 = sld [smem:[#allocation0]]
  $region74: #{tpu_custom_call.1} parent=0
    _
  %s17 = ssub.s32 1, %s15
  %s18 = scalar_select 0, %s17, %s15
  %v19 = vstv %s11
  %20 = vst [vmem:[#allocation2] sm:$0x1] %v19
  $region1: #{tpu_custom_call.1} parent=0
    #allocation3 [shape = 'u8[262144]{0}', space=vmem, size = 0x40000, scoped, tag = 'input window, operand 6, single buffered']
    #allocation4 [shape = 's32[1]{0}', space=sflag, size = 0x4, scoped, tag = 'scoped memory for tpu_custom_call.1']
    #allocation5 [shape = 's32[1]{0}', space=sflag, size = 0x4, scoped, tag = 'scoped memory for tpu_custom_call.1']
    #allocation6 [shape = 'u8[262144]{0}', space=vmem, size = 0x40000, scoped, tag = 'input window, operand 8, single buffered']
    #allocation7 [shape = 's32[1]{0}', space=sflag, size = 0x4, scoped, tag = 'scoped memory for tpu_custom_call.1']
    #allocation8 [shape = 'u8[4096]{0}', space=vmem, size = 0x1000, scoped, tag = 'output window, operand 1, single buffered']
    %21 = vsyncpa [#allocation4], 0
    %22 = vsyncpa [#allocation7], 0
    %23 = vsyncpa [#allocation5], 0
    // Predicated region
    $region2: #{tpu_custom_call.1} parent=1 // pred_check
      _
    $region3: #{tpu_custom_call.1} parent=1 // pred_check_branch
      %25 = sbr.rel (0) target = $region5
    $region4: #{tpu_custom_call.1} parent=1 // pred_region
      _
    $region5: #{tpu_custom_call.1} parent=1 // pred_fallthru
      _
    // Predicated region
    $region6: #{tpu_custom_call.1} parent=1 // pred_check
      _
    $region7: #{tpu_custom_call.1} parent=1 // pred_check_branch
      %27 = sbr.rel (0) target = $region9
    $region8: #{tpu_custom_call.1} parent=1 // pred_region
      _
    $region9: #{tpu_custom_call.1} parent=1 // pred_fallthru
      _
    // Predicated region
    $region10: #{tpu_custom_call.1} parent=1 // pred_check
      _
    $region11: #{tpu_custom_call.1} parent=1 // pred_check_branch
      %29 = sbr.rel (0) target = $region13
    $region12: #{tpu_custom_call.1} parent=1 // pred_region
      _
    $region13: #{tpu_custom_call.1} parent=1 // pred_fallthru
      _
    // Predicated region
    $region14: #{tpu_custom_call.1} parent=1 // pred_check
      _
    $region15: #{tpu_custom_call.1} parent=1 // pred_check_branch
      %31 = sbr.rel (0) target = $region17
    $region16: #{tpu_custom_call.1} parent=1 // pred_region
      _
    $region17: #{tpu_custom_call.1} parent=1 // pred_fallthru
      _
    // Predicated region
    $region18: #{tpu_custom_call.1} parent=1 // pred_check
      _
    $region19: #{tpu_custom_call.1} parent=1 // pred_check_branch
      %33 = sbr.rel (0) target = $region21
    $region20: #{tpu_custom_call.1} parent=1 // pred_region
      _
    $region21: #{tpu_custom_call.1} parent=1 // pred_fallthru
      _
    // Predicated region
    $region22: #{tpu_custom_call.1} parent=1 // pred_check
      _
    $region23: #{tpu_custom_call.1} parent=1 // pred_check_branch
      %35 = sbr.rel (0) target = $region25
    $region24: #{tpu_custom_call.1} parent=1 // pred_region
      _
    $region25: #{tpu_custom_call.1} parent=1 // pred_fallthru
      _
    // Predicated region
    $region26: #{tpu_custom_call.1} parent=1 // pred_check
      _
    $region27: #{tpu_custom_call.1} parent=1 // pred_check_branch
      %37 = sbr.rel (0) target = $region29
    $region28: #{tpu_custom_call.1} parent=1 // pred_region
      %s39 = ssub.s32 8192, 8192
      %40 = vsyncadd [#allocation4], %s39
      %s41 = sshll.u32 [#allocation3], 4
      %s42 = int_to_ptr.vmem [resolvable:$true] %s41
      %47 = dma.hbm_to_vmem [thread:$0]  %s6, 8192, %s42, [#allocation4], 128, 128, 8
    $region29: #{tpu_custom_call.1} parent=1 // pred_fallthru
      _
    // Predicated region
    $region30: #{tpu_custom_call.1} parent=1 // pred_check
      _
    $region31: #{tpu_custom_call.1} parent=1 // pred_check_branch
      %49 = sbr.rel (0) target = $region33
    $region32: #{tpu_custom_call.1} parent=1 // pred_region
      _
    $region33: #{tpu_custom_call.1} parent=1 // pred_fallthru
      _
    // Predicated region
    $region34: #{tpu_custom_call.1} parent=1 // pred_check
      _
    $region35: #{tpu_custom_call.1} parent=1 // pred_check_branch
      %51 = sbr.rel (0) target = $region37
    $region36: #{tpu_custom_call.1} parent=1 // pred_region
      %s53 = ssub.s32 8192, 8192
      %54 = vsyncadd [#allocation7], %s53
      %s55 = sshll.u32 [#allocation6], 4
      %s56 = int_to_ptr.vmem [resolvable:$true] %s55
      %61 = dma.hbm_to_vmem [thread:$0]  %s8, 8192, %s56, [#allocation7], 512, 512, 32
    $region37: #{tpu_custom_call.1} parent=1 // pred_fallthru
      _
    // Predicated region
    $region38: #{tpu_custom_call.1} parent=1 // pred_check
      _
    $region39: #{tpu_custom_call.1} parent=1 // pred_check_branch
      %63 = sbr.rel (0) target = $region41
    $region40: #{tpu_custom_call.1} parent=1 // pred_region
      _
    $region41: #{tpu_custom_call.1} parent=1 // pred_fallthru
      _
    // Predicated region
    $region42: #{tpu_custom_call.1} parent=1 // pred_check
      _
    $region43: #{tpu_custom_call.1} parent=1 // pred_check_branch
      %65 = sbr.rel (0) target = $region45
    $region44: #{tpu_custom_call.1} parent=1 // pred_region
      _
    $region45: #{tpu_custom_call.1} parent=1 // pred_fallthru
      _
    // Predicated region
    $region46: #{tpu_custom_call.1} parent=1 // pred_check
      _
    $region47: #{tpu_custom_call.1} parent=1 // pred_check_branch
      %67 = sbr.rel (0) target = $region49
    $region48: #{tpu_custom_call.1} parent=1 // pred_region
      _
    $region49: #{tpu_custom_call.1} parent=1 // pred_fallthru
      _
    // Predicated region
    $region50: #{tpu_custom_call.1} parent=1 // pred_check
      _
    $region51: #{tpu_custom_call.1} parent=1 // pred_check_branch
      %69 = sbr.rel (0) target = $region53
    $region52: #{tpu_custom_call.1} parent=1 // pred_region
      %70 = dma.done [#allocation4], 8192
    $region53: #{tpu_custom_call.1} parent=1 // pred_fallthru
      _
    // Predicated region
    $region54: #{tpu_custom_call.1} parent=1 // pred_check
      _
    $region55: #{tpu_custom_call.1} parent=1 // pred_check_branch
      %72 = sbr.rel (0) target = $region57
    $region56: #{tpu_custom_call.1} parent=1 // pred_region
      %73 = dma.done [#allocation7], 8192
    $region57: #{tpu_custom_call.1} parent=1 // pred_fallthru
      _
    %v74 = vld [vmem:[%s0] sm:$0xff]
    %v75 = vld [vmem:[%s1] sm:$0xff]
    %v76 = vld [vmem:[%s2] sm:$0xff]
    %v77 = vld [vmem:[%s3] sm:$0xf]
    %79 = vset.pattern.permute.xlu0 0
    %80 = vperm.xlu0 %79, %v74
    %v81 = vpop.permute.xlu0 %80
    %v84 = vlaneseq
    %v85 = vshrl.u32 %v84, 7
    %v86 = vsub.s32 0, %v85
    %v87 = vrot.slane %v77, %v86
    %v88 = vlaneseq
    %v89 = vshrl.u32 %v88, 7
    %v90 = vsub.s32 1, %v89
    %v91 = vrot.slane %v77, %v90
    %v92 = vlaneseq
    %v93 = vshrl.u32 %v92, 7
    %v94 = vsub.s32 2, %v93
    %v95 = vrot.slane %v77, %v94
    %v96 = vlaneseq
    %v97 = vshrl.u32 %v96, 7
    %v98 = vsub.s32 3, %v97
    %v99 = vrot.slane %v77, %v98
    %v104 = vmul.f32 %v81, %v87
    %v105 = vmul.f32 %v81, %v91
    %v106 = vmul.f32 %v81, %v95
    %v107 = vmul.f32 %v81, %v99
    %v108 = vld [vmem:[%s4] sm:$0xff]
    %v109 = vld [vmem:[%s4 + $0x8] sm:$0xff]
    %v110 = vld [vmem:[%s4 + $0x10] sm:$0xff]
    %v111 = vld [vmem:[%s4 + $0x18] sm:$0xff]
    %v112 = vld [vmem:[%s4 + $0x20] sm:$0xff]
    %v113 = vld [vmem:[%s4 + $0x28] sm:$0xff]
    %v114 = vld [vmem:[%s4 + $0x30] sm:$0xff]
    %v115 = vld [vmem:[%s4 + $0x38] sm:$0xff]
    %v116 = vld [vmem:[%s4 + $0x40] sm:$0xff]
    %v117 = vld [vmem:[%s4 + $0x48] sm:$0xff]
    %v118 = vld [vmem:[%s4 + $0x50] sm:$0xff]
    %v119 = vld [vmem:[%s4 + $0x58] sm:$0xff]
    %v120 = vld [vmem:[%s4 + $0x60] sm:$0xff]
    %v121 = vld [vmem:[%s4 + $0x68] sm:$0xff]
    %v122 = vld [vmem:[%s4 + $0x70] sm:$0xff]
    %v123 = vld [vmem:[%s4 + $0x78] sm:$0xff]
    %v124 = vld [vmem:[%s4 + $0x80] sm:$0xff]
    %v125 = vld [vmem:[%s4 + $0x88] sm:$0xff]
    %v126 = vld [vmem:[%s4 + $0x90] sm:$0xff]
    %v127 = vld [vmem:[%s4 + $0x98] sm:$0xff]
    %v128 = vld [vmem:[%s4 + $0xa0] sm:$0xff]
    %v129 = vld [vmem:[%s4 + $0xa8] sm:$0xff]
    %v130 = vld [vmem:[%s4 + $0xb0] sm:$0xff]
    %v131 = vld [vmem:[%s4 + $0xb8] sm:$0xff]
    %v132 = vld [vmem:[%s4 + $0xc0] sm:$0xff]
    %v133 = vld [vmem:[%s4 + $0xc8] sm:$0xff]
    %v134 = vld [vmem:[%s4 + $0xd0] sm:$0xff]
    %v135 = vld [vmem:[%s4 + $0xd8] sm:$0xff]
    %v136 = vld [vmem:[%s4 + $0xe0] sm:$0xff]
    %v137 = vld [vmem:[%s4 + $0xe8] sm:$0xff]
    %v138 = vld [vmem:[%s4 + $0xf0] sm:$0xff]
    %v139 = vld [vmem:[%s4 + $0xf8] sm:$0xff]
    %v140 = vld [vmem:[%s4 + $0x100] sm:$0xff]
    %v141 = vld [vmem:[%s4 + $0x108] sm:$0xff]
    %v142 = vld [vmem:[%s4 + $0x110] sm:$0xff]
    %v143 = vld [vmem:[%s4 + $0x118] sm:$0xff]
    %v144 = vld [vmem:[%s4 + $0x120] sm:$0xff]
    %v145 = vld [vmem:[%s4 + $0x128] sm:$0xff]
    %v146 = vld [vmem:[%s4 + $0x130] sm:$0xff]
    %v147 = vld [vmem:[%s4 + $0x138] sm:$0xff]
    %v148 = vld [vmem:[%s4 + $0x140] sm:$0xff]
    %v149 = vld [vmem:[%s4 + $0x148] sm:$0xff]
    %v150 = vld [vmem:[%s4 + $0x150] sm:$0xff]
    %v151 = vld [vmem:[%s4 + $0x158] sm:$0xff]
    %v152 = vld [vmem:[%s4 + $0x160] sm:$0xff]
    %v153 = vld [vmem:[%s4 + $0x168] sm:$0xff]
    %v154 = vld [vmem:[%s4 + $0x170] sm:$0xff]
    %v155 = vld [vmem:[%s4 + $0x178] sm:$0xff]
    %v156 = vld [vmem:[%s4 + $0x180] sm:$0xff]
    %v157 = vld [vmem:[%s4 + $0x188] sm:$0xff]
    %v158 = vld [vmem:[%s4 + $0x190] sm:$0xff]
    %v159 = vld [vmem:[%s4 + $0x198] sm:$0xff]
    %v160 = vld [vmem:[%s4 + $0x1a0] sm:$0xff]
    %v161 = vld [vmem:[%s4 + $0x1a8] sm:$0xff]
    %v162 = vld [vmem:[%s4 + $0x1b0] sm:$0xff]
    %v163 = vld [vmem:[%s4 + $0x1b8] sm:$0xff]
    %v164 = vld [vmem:[%s4 + $0x1c0] sm:$0xff]
    %v165 = vld [vmem:[%s4 + $0x1c8] sm:$0xff]
    %v166 = vld [vmem:[%s4 + $0x1d0] sm:$0xff]
    %v167 = vld [vmem:[%s4 + $0x1d8] sm:$0xff]
    %v168 = vld [vmem:[%s4 + $0x1e0] sm:$0xff]
    %v169 = vld [vmem:[%s4 + $0x1e8] sm:$0xff]
    %v170 = vld [vmem:[%s4 + $0x1f0] sm:$0xff]
    %v171 = vld [vmem:[%s4 + $0x1f8] sm:$0xff]
    %172 = vmatprep.subr.mxu0 %v109
    %173 = vmatpush1.msra.mxu0 %v108
    %174 = vmatprep.subr.mxu0 %v113
    %175 = vmatpush1.msra.mxu0 %v112
    %176 = vmatprep.subr.mxu0 %v117
    %177 = vmatpush1.msra.mxu0 %v116
    %178 = vmatprep.subr.mxu0 %v121
    %179 = vmatpush1.msra.mxu0 %v120
    %180 = vmatprep.subr.mxu0 %v125
    %181 = vmatpush1.msra.mxu0 %v124
    %182 = vmatprep.subr.mxu0 %v129
    %183 = vmatpush1.msra.mxu0 %v128
    %184 = vmatprep.subr.mxu0 %v133
    %185 = vmatpush1.msra.mxu0 %v132
    %186 = vmatprep.subr.mxu0 %v137
    %187 = vmatpush1.msra.mxu0 %v136
    %188 = vmatprep.subr.mxu0 %v141
    %189 = vmatpush1.msra.mxu0 %v140
    %190 = vmatprep.subr.mxu0 %v145
    %191 = vmatpush1.msra.mxu0 %v144
    %192 = vmatprep.subr.mxu0 %v149
    %193 = vmatpush1.msra.mxu0 %v148
    %194 = vmatprep.subr.mxu0 %v153
    %195 = vmatpush1.msra.mxu0 %v152
    %196 = vmatprep.subr.mxu0 %v157
    %197 = vmatpush1.msra.mxu0 %v156
    %198 = vmatprep.subr.mxu0 %v161
    %199 = vmatpush1.msra.mxu0 %v160
    %200 = vmatprep.subr.mxu0 %v165
    %201 = vmatpush1.msra.mxu0 %v164
    %202 = vmatprep.subr.mxu0 %v169
    %203 = vmatpush1.msra.mxu0 %v168
    %204 = vmatprep.subr.mxu0 0.0
    %205 = vmatpush1.msra.mxu0 0.0
    %206 = vmatprep.subr.mxu0 0.0
    %207 = vmatpush1.msra.mxu0 0.0
    %208 = vmatprep.subr.mxu0 0.0
    %209 = vmatpush1.msra.mxu0 0.0
    %210 = vmatprep.subr.mxu0 0.0
    %211 = vmatpush1.msra.mxu0 0.0
    %212 = vmatprep.subr.mxu0 0.0
    %213 = vmatpush1.msra.mxu0 0.0
    %214 = vmatprep.subr.mxu0 0.0
    %215 = vmatpush1.msra.mxu0 0.0
    %216 = vmatprep.subr.mxu0 0.0
    %217 = vmatpush1.msra.mxu0 0.0
    %218 = vmatprep.subr.mxu0 0.0
    %219 = vmatpush1.msra.mxu0 0.0
    %220 = vmatprep.subr.mxu0 0.0
    %221 = vmatpush1.msra.mxu0 0.0
    %222 = vmatprep.subr.mxu0 0.0
    %223 = vmatpush1.msra.mxu0 0.0
    %224 = vmatprep.subr.mxu0 0.0
    %225 = vmatpush1.msra.mxu0 0.0
    %226 = vmatprep.subr.mxu0 0.0
    %227 = vmatpush1.msra.mxu0 0.0
    %228 = vmatprep.subr.mxu0 0.0
    %229 = vmatpush1.msra.mxu0 0.0
    %230 = vmatprep.subr.mxu0 0.0
    %231 = vmatpush1.msra.mxu0 0.0
    %232 = vmatprep.subr.mxu0 0.0
    %233 = vmatpush1.msra.mxu0 0.0
    %234 = vmatprep.subr.mxu0 0.0
    %235 = vmatpush1.msra.mxu0 0.0
    %236 = vmatprep.mubr.f32.mxu0 0.0
    %237 = vmatmul.mubr.f32.gmra.mrb[0].mxu0 %v75
    %v238 = vpop.f32.mrb[0].mxu0
    %v239 = vadd.f32 0.0, %v238
    %v240 = vpop.f32.mrb[0].mxu0
    %v241 = vadd.f32 0.0, %v240
    %242 = vdwg.mxu0
    %243 = vmatprep.subr.mxu0 %v111
    %244 = vmatpush1.msra.mxu0 %v110
    %245 = vmatprep.subr.mxu0 %v115
    %246 = vmatpush1.msra.mxu0 %v114
    %247 = vmatprep.subr.mxu0 %v119
    %248 = vmatpush1.msra.mxu0 %v118
    %249 = vmatprep.subr.mxu0 %v123
    %250 = vmatpush1.msra.mxu0 %v122
    %251 = vmatprep.subr.mxu0 %v127
    %252 = vmatpush1.msra.mxu0 %v126
    %253 = vmatprep.subr.mxu0 %v131
    %254 = vmatpush1.msra.mxu0 %v130
    %255 = vmatprep.subr.mxu0 %v135
    %256 = vmatpush1.msra.mxu0 %v134
    %257 = vmatprep.subr.mxu0 %v139
    %258 = vmatpush1.msra.mxu0 %v138
    %259 = vmatprep.subr.mxu0 %v143
    %260 = vmatpush1.msra.mxu0 %v142
    %261 = vmatprep.subr.mxu0 %v147
    %262 = vmatpush1.msra.mxu0 %v146
    %263 = vmatprep.subr.mxu0 %v151
    %264 = vmatpush1.msra.mxu0 %v150
    %265 = vmatprep.subr.mxu0 %v155
    %266 = vmatpush1.msra.mxu0 %v154
    %267 = vmatprep.subr.mxu0 %v159
    %268 = vmatpush1.msra.mxu0 %v158
    %269 = vmatprep.subr.mxu0 %v163
    %270 = vmatpush1.msra.mxu0 %v162
    %271 = vmatprep.subr.mxu0 %v167
    %272 = vmatpush1.msra.mxu0 %v166
    %273 = vmatprep.subr.mxu0 %v171
    %274 = vmatpush1.msra.mxu0 %v170
    %275 = vmatprep.subr.mxu0 0.0
    %276 = vmatpush1.msra.mxu0 0.0
    %277 = vmatprep.subr.mxu0 0.0
    %278 = vmatpush1.msra.mxu0 0.0
    %279 = vmatprep.subr.mxu0 0.0
    %280 = vmatpush1.msra.mxu0 0.0
    %281 = vmatprep.subr.mxu0 0.0
    %282 = vmatpush1.msra.mxu0 0.0
    %283 = vmatprep.subr.mxu0 0.0
    %284 = vmatpush1.msra.mxu0 0.0
    %285 = vmatprep.subr.mxu0 0.0
    %286 = vmatpush1.msra.mxu0 0.0
    %287 = vmatprep.subr.mxu0 0.0
    %288 = vmatpush1.msra.mxu0 0.0
    %289 = vmatprep.subr.mxu0 0.0
    %290 = vmatpush1.msra.mxu0 0.0
    %291 = vmatprep.subr.mxu0 0.0
    %292 = vmatpush1.msra.mxu0 0.0
    %293 = vmatprep.subr.mxu0 0.0
    %294 = vmatpush1.msra.mxu0 0.0
    %295 = vmatprep.subr.mxu0 0.0
    %296 = vmatpush1.msra.mxu0 0.0
    %297 = vmatprep.subr.mxu0 0.0
    %298 = vmatpush1.msra.mxu0 0.0
    %299 = vmatprep.subr.mxu0 0.0
    %300 = vmatpush1.msra.mxu0 0.0
    %301 = vmatprep.subr.mxu0 0.0
    %302 = vmatpush1.msra.mxu0 0.0
    %303 = vmatprep.subr.mxu0 0.0
    %304 = vmatpush1.msra.mxu0 0.0
    %305 = vmatprep.subr.mxu0 0.0
    %306 = vmatpush1.msra.mxu0 0.0
    %307 = vmatprep.mubr.f32.mxu0 0.0
    %308 = vmatmul.mubr.f32.gmra.mrb[0].mxu0 %v75
    %v309 = vpop.f32.mrb[0].mxu0
    %v310 = vadd.f32 0.0, %v309
    %v311 = vpop.f32.mrb[0].mxu0
    %v312 = vadd.f32 0.0, %v311
    %313 = vdwg.mxu0
    %v314 = vadd.f32 %v104, %v239
    %v315 = vadd.f32 %v105, %v241
    %v316 = vadd.f32 %v106, %v310
    %v317 = vadd.f32 %v107, %v312
    %v318 = vld [vmem:[%s5] sm:$0xf]
    %v320 = vlaneseq
    %v321 = vshrl.u32 %v320, 7
    %v322 = vsub.s32 0, %v321
    %v323 = vrot.slane %v318, %v322
    %v324 = vlaneseq
    %v325 = vshrl.u32 %v324, 7
    %v326 = vsub.s32 1, %v325
    %v327 = vrot.slane %v318, %v326
    %v328 = vlaneseq
    %v329 = vshrl.u32 %v328, 7
    %v330 = vsub.s32 2, %v329
    %v331 = vrot.slane %v318, %v330
    %v332 = vlaneseq
    %v333 = vshrl.u32 %v332, 7
    %v334 = vsub.s32 3, %v333
    %v335 = vrot.slane %v318, %v334
    %v340 = vadd.f32 %v314, %v323
    %v341 = vadd.f32 %v315, %v327
    %v342 = vadd.f32 %v316, %v331
    %v343 = vadd.f32 %v317, %v335
    %vm344 = vcmp.gt.f32.partialorder %v340, 0.0
    %vm345 = vcmp.gt.f32.partialorder %v341, 0.0
    %vm346 = vcmp.gt.f32.partialorder %v342, 0.0
    %vm347 = vcmp.gt.f32.partialorder %v343, 0.0
    %v348 = vmin.f32 %v340, 0.0
    %v349 = vmin.f32 %v341, 0.0
    %v350 = vmin.f32 %v342, 0.0
    %v351 = vmin.f32 %v343, 0.0
    %v352 = vmul.f32 %v348, 1.442695
    %v353 = vpow.pop %v352
    %v354 = vmul.f32 %v349, 1.442695
    %v355 = vpow.pop %v354
    %v356 = vmul.f32 %v350, 1.442695
    %v357 = vpow.pop %v356
    %v358 = vmul.f32 %v351, 1.442695
    %v359 = vpow.pop %v358
    %v360 = vsub.f32 %v353, 1.0
    %v361 = vsub.f32 %v355, 1.0
    %v362 = vsub.f32 %v357, 1.0
    %v363 = vsub.f32 %v359, 1.0
    %v364 = vsel %vm344, %v340, %v360
    %v365 = vsel %vm345, %v341, %v361
    %v366 = vsel %vm346, %v342, %v362
    %v367 = vsel %vm347, %v343, %v363
    %v368 = vld [vmem:[#allocation3] sm:$0xff]
    %v369 = vld [vmem:[#allocation3 + $0x8] sm:$0xff]
    %v370 = vld [vmem:[#allocation3 + $0x10] sm:$0xff]
    %v371 = vld [vmem:[#allocation3 + $0x18] sm:$0xff]
    %v372 = vld [vmem:[#allocation3 + $0x20] sm:$0xff]
    %v373 = vld [vmem:[#allocation3 + $0x28] sm:$0xff]
    %v374 = vld [vmem:[#allocation3 + $0x30] sm:$0xff]
    %v375 = vld [vmem:[#allocation3 + $0x38] sm:$0xff]
    %v376 = vld [vmem:[#allocation3 + $0x40] sm:$0xff]
    %v377 = vld [vmem:[#allocation3 + $0x48] sm:$0xff]
    %v378 = vld [vmem:[#allocation3 + $0x50] sm:$0xff]
    %v379 = vld [vmem:[#allocation3 + $0x58] sm:$0xff]
    %v380 = vld [vmem:[#allocation3 + $0x60] sm:$0xff]
    %v381 = vld [vmem:[#allocation3 + $0x68] sm:$0xff]
    %v382 = vld [vmem:[#allocation3 + $0x70] sm:$0xff]
    %v383 = vld [vmem:[#allocation3 + $0x78] sm:$0xff]
    %v384 = vld [vmem:[#allocation3 + $0x80] sm:$0xff]
    %v385 = vld [vmem:[#allocation3 + $0x88] sm:$0xff]
    %v386 = vld [vmem:[#allocation3 + $0x90] sm:$0xff]
    %v387 = vld [vmem:[#allocation3 + $0x98] sm:$0xff]
    %v388 = vld [vmem:[#allocation3 + $0xa0] sm:$0xff]
    %v389 = vld [vmem:[#allocation3 + $0xa8] sm:$0xff]
    %v390 = vld [vmem:[#allocation3 + $0xb0] sm:$0xff]
    %v391 = vld [vmem:[#allocation3 + $0xb8] sm:$0xff]
    %v392 = vld [vmem:[#allocation3 + $0xc0] sm:$0xff]
    %v393 = vld [vmem:[#allocation3 + $0xc8] sm:$0xff]
    %v394 = vld [vmem:[#allocation3 + $0xd0] sm:$0xff]
    %v395 = vld [vmem:[#allocation3 + $0xd8] sm:$0xff]
    %v396 = vld [vmem:[#allocation3 + $0xe0] sm:$0xff]
    %v397 = vld [vmem:[#allocation3 + $0xe8] sm:$0xff]
    %v398 = vld [vmem:[#allocation3 + $0xf0] sm:$0xff]
    %v399 = vld [vmem:[#allocation3 + $0xf8] sm:$0xff]
    %v400 = vld [vmem:[#allocation3 + $0x100] sm:$0xff]
    %v401 = vld [vmem:[#allocation3 + $0x108] sm:$0xff]
    %v402 = vld [vmem:[#allocation3 + $0x110] sm:$0xff]
    %v403 = vld [vmem:[#allocation3 + $0x118] sm:$0xff]
    %v404 = vld [vmem:[#allocation3 + $0x120] sm:$0xff]
    %v405 = vld [vmem:[#allocation3 + $0x128] sm:$0xff]
    %v406 = vld [vmem:[#allocation3 + $0x130] sm:$0xff]
    %v407 = vld [vmem:[#allocation3 + $0x138] sm:$0xff]
    %v408 = vld [vmem:[#allocation3 + $0x140] sm:$0xff]
    %v409 = vld [vmem:[#allocation3 + $0x148] sm:$0xff]
    %v410 = vld [vmem:[#allocation3 + $0x150] sm:$0xff]
    %v411 = vld [vmem:[#allocation3 + $0x158] sm:$0xff]
    %v412 = vld [vmem:[#allocation3 + $0x160] sm:$0xff]
    %v413 = vld [vmem:[#allocation3 + $0x168] sm:$0xff]
    %v414 = vld [vmem:[#allocation3 + $0x170] sm:$0xff]
    %v415 = vld [vmem:[#allocation3 + $0x178] sm:$0xff]
    %v416 = vld [vmem:[#allocation3 + $0x180] sm:$0xff]
    %v417 = vld [vmem:[#allocation3 + $0x188] sm:$0xff]
    %v418 = vld [vmem:[#allocation3 + $0x190] sm:$0xff]
    %v419 = vld [vmem:[#allocation3 + $0x198] sm:$0xff]
    %v420 = vld [vmem:[#allocation3 + $0x1a0] sm:$0xff]
    %v421 = vld [vmem:[#allocation3 + $0x1a8] sm:$0xff]
    %v422 = vld [vmem:[#allocation3 + $0x1b0] sm:$0xff]
    %v423 = vld [vmem:[#allocation3 + $0x1b8] sm:$0xff]
    %v424 = vld [vmem:[#allocation3 + $0x1c0] sm:$0xff]
    %v425 = vld [vmem:[#allocation3 + $0x1c8] sm:$0xff]
    %v426 = vld [vmem:[#allocation3 + $0x1d0] sm:$0xff]
    %v427 = vld [vmem:[#allocation3 + $0x1d8] sm:$0xff]
    %v428 = vld [vmem:[#allocation3 + $0x1e0] sm:$0xff]
    %v429 = vld [vmem:[#allocation3 + $0x1e8] sm:$0xff]
    %v430 = vld [vmem:[#allocation3 + $0x1f0] sm:$0xff]
    %v431 = vld [vmem:[#allocation3 + $0x1f8] sm:$0xff]
    %v432 = vld [vmem:[%s7] sm:$0x1]
    %v434 = vlaneseq
    %v435 = vshrl.u32 %v434, 7
    %v436 = vsub.s32 0, %v435
    %v437 = vrot.slane %v432, %v436
    %439 = vmatprep.subr.mxu0 0.0
    %440 = vmatpush1.msra.mxu0 %v368
    %441 = vmatprep.subr.mxu0 0.0
    %442 = vmatpush1.msra.mxu0 %v369
    %443 = vmatprep.subr.mxu0 0.0
    %444 = vmatpush1.msra.mxu0 %v370
    %445 = vmatprep.subr.mxu0 0.0
    %446 = vmatpush1.msra.mxu0 %v371
    %447 = vmatprep.subr.mxu0 0.0
    %448 = vmatpush1.msra.mxu0 %v372
    %449 = vmatprep.subr.mxu0 0.0
    %450 = vmatpush1.msra.mxu0 %v373
    %451 = vmatprep.subr.mxu0 0.0
    %452 = vmatpush1.msra.mxu0 %v374
    %453 = vmatprep.subr.mxu0 0.0
    %454 = vmatpush1.msra.mxu0 %v375
    %455 = vmatprep.subr.mxu0 0.0
    %456 = vmatpush1.msra.mxu0 %v376
    %457 = vmatprep.subr.mxu0 0.0
    %458 = vmatpush1.msra.mxu0 %v377
    %459 = vmatprep.subr.mxu0 0.0
    %460 = vmatpush1.msra.mxu0 %v378
    %461 = vmatprep.subr.mxu0 0.0
    %462 = vmatpush1.msra.mxu0 %v379
    %463 = vmatprep.subr.mxu0 0.0
    %464 = vmatpush1.msra.mxu0 %v380
    %465 = vmatprep.subr.mxu0 0.0
    %466 = vmatpush1.msra.mxu0 %v381
    %467 = vmatprep.subr.mxu0 0.0
    %468 = vmatpush1.msra.mxu0 %v382
    %469 = vmatprep.subr.mxu0 0.0
    %470 = vmatpush1.msra.mxu0 %v383
    %471 = vmatprep.subr.mxu0 0.0
    %472 = vmatpush1.msra.mxu0 %v384
    %473 = vmatprep.subr.mxu0 0.0
    %474 = vmatpush1.msra.mxu0 %v385
    %475 = vmatprep.subr.mxu0 0.0
    %476 = vmatpush1.msra.mxu0 %v386
    %477 = vmatprep.subr.mxu0 0.0
    %478 = vmatpush1.msra.mxu0 %v387
    %479 = vmatprep.subr.mxu0 0.0
    %480 = vmatpush1.msra.mxu0 %v388
    %481 = vmatprep.subr.mxu0 0.0
    %482 = vmatpush1.msra.mxu0 %v389
    %483 = vmatprep.subr.mxu0 0.0
    %484 = vmatpush1.msra.mxu0 %v390
    %485 = vmatprep.subr.mxu0 0.0
    %486 = vmatpush1.msra.mxu0 %v391
    %487 = vmatprep.subr.mxu0 0.0
    %488 = vmatpush1.msra.mxu0 %v392
    %489 = vmatprep.subr.mxu0 0.0
    %490 = vmatpush1.msra.mxu0 %v393
    %491 = vmatprep.subr.mxu0 0.0
    %492 = vmatpush1.msra.mxu0 %v394
    %493 = vmatprep.subr.mxu0 0.0
    %494 = vmatpush1.msra.mxu0 %v395
    %495 = vmatprep.subr.mxu0 0.0
    %496 = vmatpush1.msra.mxu0 %v396
    %497 = vmatprep.subr.mxu0 0.0
    %498 = vmatpush1.msra.mxu0 %v397
    %499 = vmatprep.subr.mxu0 0.0
    %500 = vmatpush1.msra.mxu0 %v398
    %501 = vmatprep.subr.mxu0 0.0
    %502 = vmatpush1.msra.mxu0 %v399
    %503 = vmatprep.mubr.f32.mxu0 %v365
    %504 = vmatmul.mubr.f32.gmra.mrb[0].mxu0 %v364
    %v505 = vpop.f32.mrb[0].mxu0
    %v506 = vadd.f32 %v437, %v505
    %v507 = vpop.f32.mrb[0].mxu0
    %508 = vdwg.mxu0
    %509 = vmatprep.subr.mxu0 0.0
    %510 = vmatpush1.msra.mxu0 %v400
    %511 = vmatprep.subr.mxu0 0.0
    %512 = vmatpush1.msra.mxu0 %v401
    %513 = vmatprep.subr.mxu0 0.0
    %514 = vmatpush1.msra.mxu0 %v402
    %515 = vmatprep.subr.mxu0 0.0
    %516 = vmatpush1.msra.mxu0 %v403
    %517 = vmatprep.subr.mxu0 0.0
    %518 = vmatpush1.msra.mxu0 %v404
    %519 = vmatprep.subr.mxu0 0.0
    %520 = vmatpush1.msra.mxu0 %v405
    %521 = vmatprep.subr.mxu0 0.0
    %522 = vmatpush1.msra.mxu0 %v406
    %523 = vmatprep.subr.mxu0 0.0
    %524 = vmatpush1.msra.mxu0 %v407
    %525 = vmatprep.subr.mxu0 0.0
    %526 = vmatpush1.msra.mxu0 %v408
    %527 = vmatprep.subr.mxu0 0.0
    %528 = vmatpush1.msra.mxu0 %v409
    %529 = vmatprep.subr.mxu0 0.0
    %530 = vmatpush1.msra.mxu0 %v410
    %531 = vmatprep.subr.mxu0 0.0
    %532 = vmatpush1.msra.mxu0 %v411
    %533 = vmatprep.subr.mxu0 0.0
    %534 = vmatpush1.msra.mxu0 %v412
    %535 = vmatprep.subr.mxu0 0.0
    %536 = vmatpush1.msra.mxu0 %v413
    %537 = vmatprep.subr.mxu0 0.0
    %538 = vmatpush1.msra.mxu0 %v414
    %539 = vmatprep.subr.mxu0 0.0
    %540 = vmatpush1.msra.mxu0 %v415
    %541 = vmatprep.subr.mxu0 0.0
    %542 = vmatpush1.msra.mxu0 %v416
    %543 = vmatprep.subr.mxu0 0.0
    %544 = vmatpush1.msra.mxu0 %v417
    %545 = vmatprep.subr.mxu0 0.0
    %546 = vmatpush1.msra.mxu0 %v418
    %547 = vmatprep.subr.mxu0 0.0
    %548 = vmatpush1.msra.mxu0 %v419
    %549 = vmatprep.subr.mxu0 0.0
    %550 = vmatpush1.msra.mxu0 %v420
    %551 = vmatprep.subr.mxu0 0.0
    %552 = vmatpush1.msra.mxu0 %v421
    %553 = vmatprep.subr.mxu0 0.0
    %554 = vmatpush1.msra.mxu0 %v422
    %555 = vmatprep.subr.mxu0 0.0
    %556 = vmatpush1.msra.mxu0 %v423
    %557 = vmatprep.subr.mxu0 0.0
    %558 = vmatpush1.msra.mxu0 %v424
    %559 = vmatprep.subr.mxu0 0.0
    %560 = vmatpush1.msra.mxu0 %v425
    %561 = vmatprep.subr.mxu0 0.0
    %562 = vmatpush1.msra.mxu0 %v426
    %563 = vmatprep.subr.mxu0 0.0
    %564 = vmatpush1.msra.mxu0 %v427
    %565 = vmatprep.subr.mxu0 0.0
    %566 = vmatpush1.msra.mxu0 %v428
    %567 = vmatprep.subr.mxu0 0.0
    %568 = vmatpush1.msra.mxu0 %v429
    %569 = vmatprep.subr.mxu0 0.0
    %570 = vmatpush1.msra.mxu0 %v430
    %571 = vmatprep.subr.mxu0 0.0
    %572 = vmatpush1.msra.mxu0 %v431
    %573 = vmatprep.mubr.f32.mxu0 %v367
    %574 = vmatmul.mubr.f32.gmra.mrb[0].mxu0 %v366
    %v575 = vpop.f32.mrb[0].mxu0
    %v576 = vadd.f32 %v506, %v575
    %v577 = vpop.f32.mrb[0].mxu0
    %578 = vdwg.mxu0
    %579 = vst [vmem:[#allocation8] sm:$0xff] %v576
    %581 = vrot.lane.b32.xlu0 %v576, 64
    %v582 = vpop.permute.xlu0 %581
    %v584 = vmul.f32 %v582, 0.5
    %v585 = vmul.f32 %v584, 1.442695
    %v586 = vpow.pop %v585
    %v587 = vlaneseq
    %v588 = vand.u32 %v587, 127
    %vm589 = vcmp.lt.s32.totalorder %v588, 64
    %v590 = vmul.f32 %v76, %v586
    %v591 = vadd.f32 %v576, %v590
    %v592 = vsel %vm589, %v591, %v75
    %v593 = vld [vmem:[#allocation6] sm:$0xff]
    %v594 = vld [vmem:[#allocation6 + $0x8] sm:$0xff]
    %v595 = vld [vmem:[#allocation6 + $0x10] sm:$0xff]
    %v596 = vld [vmem:[#allocation6 + $0x18] sm:$0xff]
    %v597 = vld [vmem:[#allocation6 + $0x20] sm:$0xff]
    %v598 = vld [vmem:[#allocation6 + $0x28] sm:$0xff]
    %v599 = vld [vmem:[#allocation6 + $0x30] sm:$0xff]
    %v600 = vld [vmem:[#allocation6 + $0x38] sm:$0xff]
    %v601 = vld [vmem:[#allocation6 + $0x40] sm:$0xff]
    %v602 = vld [vmem:[#allocation6 + $0x48] sm:$0xff]
    %v603 = vld [vmem:[#allocation6 + $0x50] sm:$0xff]
    %v604 = vld [vmem:[#allocation6 + $0x58] sm:$0xff]
    %v605 = vld [vmem:[#allocation6 + $0x60] sm:$0xff]
    %v606 = vld [vmem:[#allocation6 + $0x68] sm:$0xff]
    %v607 = vld [vmem:[#allocation6 + $0x70] sm:$0xff]
    %v608 = vld [vmem:[#allocation6 + $0x78] sm:$0xff]
    %v609 = vld [vmem:[#allocation6 + $0x80] sm:$0xff]
    %v610 = vld [vmem:[#allocation6 + $0x88] sm:$0xff]
    %v611 = vld [vmem:[#allocation6 + $0x90] sm:$0xff]
    %v612 = vld [vmem:[#allocation6 + $0x98] sm:$0xff]
    %v613 = vld [vmem:[#allocation6 + $0xa0] sm:$0xff]
    %v614 = vld [vmem:[#allocation6 + $0xa8] sm:$0xff]
    %v615 = vld [vmem:[#allocation6 + $0xb0] sm:$0xff]
    %v616 = vld [vmem:[#allocation6 + $0xb8] sm:$0xff]
    %v617 = vld [vmem:[#allocation6 + $0xc0] sm:$0xff]
    %v618 = vld [vmem:[#allocation6 + $0xc8] sm:$0xff]
    %v619 = vld [vmem:[#allocation6 + $0xd0] sm:$0xff]
    %v620 = vld [vmem:[#allocation6 + $0xd8] sm:$0xff]
    %v621 = vld [vmem:[#allocation6 + $0xe0] sm:$0xff]
    %v622 = vld [vmem:[#allocation6 + $0xe8] sm:$0xff]
    %v623 = vld [vmem:[#allocation6 + $0xf0] sm:$0xff]
    %v624 = vld [vmem:[#allocation6 + $0xf8] sm:$0xff]
    %v625 = vld [vmem:[#allocation6 + $0x100] sm:$0xff]
    %v626 = vld [vmem:[#allocation6 + $0x108] sm:$0xff]
    %v627 = vld [vmem:[#allocation6 + $0x110] sm:$0xff]
    %v628 = vld [vmem:[#allocation6 + $0x118] sm:$0xff]
    %v629 = vld [vmem:[#allocation6 + $0x120] sm:$0xff]
    %v630 = vld [vmem:[#allocation6 + $0x128] sm:$0xff]
    %v631 = vld [vmem:[#allocation6 + $0x130] sm:$0xff]
    %v632 = vld [vmem:[#allocation6 + $0x138] sm:$0xff]
    %v633 = vld [vmem:[#allocation6 + $0x140] sm:$0xff]
    %v634 = vld [vmem:[#allocation6 + $0x148] sm:$0xff]
    %v635 = vld [vmem:[#allocation6 + $0x150] sm:$0xff]
    %v636 = vld [vmem:[#allocation6 + $0x158] sm:$0xff]
    %v637 = vld [vmem:[#allocation6 + $0x160] sm:$0xff]
    %v638 = vld [vmem:[#allocation6 + $0x168] sm:$0xff]
    %v639 = vld [vmem:[#allocation6 + $0x170] sm:$0xff]
    %v640 = vld [vmem:[#allocation6 + $0x178] sm:$0xff]
    %v641 = vld [vmem:[#allocation6 + $0x180] sm:$0xff]
    %v642 = vld [vmem:[#allocation6 + $0x188] sm:$0xff]
    %v643 = vld [vmem:[#allocation6 + $0x190] sm:$0xff]
    %v644 = vld [vmem:[#allocation6 + $0x198] sm:$0xff]
    %v645 = vld [vmem:[#allocation6 + $0x1a0] sm:$0xff]
    %v646 = vld [vmem:[#allocation6 + $0x1a8] sm:$0xff]
    %v647 = vld [vmem:[#allocation6 + $0x1b0] sm:$0xff]
    %v648 = vld [vmem:[#allocation6 + $0x1b8] sm:$0xff]
    %v649 = vld [vmem:[#allocation6 + $0x1c0] sm:$0xff]
    %v650 = vld [vmem:[#allocation6 + $0x1c8] sm:$0xff]
    %v651 = vld [vmem:[#allocation6 + $0x1d0] sm:$0xff]
    %v652 = vld [vmem:[#allocation6 + $0x1d8] sm:$0xff]
    %v653 = vld [vmem:[#allocation6 + $0x1e0] sm:$0xff]
    %v654 = vld [vmem:[#allocation6 + $0x1e8] sm:$0xff]
    %v655 = vld [vmem:[#allocation6 + $0x1f0] sm:$0xff]
    %v656 = vld [vmem:[#allocation6 + $0x1f8] sm:$0xff]
    %v657 = vld [vmem:[%s9] sm:$0xf]
    %v659 = vlaneseq
    %v660 = vshrl.u32 %v659, 7
    %v661 = vsub.s32 0, %v660
    %v662 = vrot.slane %v657, %v661
    %v663 = vlaneseq
    %v664 = vshrl.u32 %v663, 7
    %v665 = vsub.s32 1, %v664
    %v666 = vrot.slane %v657, %v665
    %v667 = vlaneseq
    %v668 = vshrl.u32 %v667, 7
    %v669 = vsub.s32 2, %v668
    %v670 = vrot.slane %v657, %v669
    %v671 = vlaneseq
    %v672 = vshrl.u32 %v671, 7
    %v673 = vsub.s32 3, %v672
    %v674 = vrot.slane %v657, %v673
    %679 = vmatprep.subr.mxu0 %v594
    %680 = vmatpush1.msra.mxu0 %v593
    %681 = vmatprep.subr.mxu0 %v598
    %682 = vmatpush1.msra.mxu0 %v597
    %683 = vmatprep.subr.mxu0 %v602
    %684 = vmatpush1.msra.mxu0 %v601
    %685 = vmatprep.subr.mxu0 %v606
    %686 = vmatpush1.msra.mxu0 %v605
    %687 = vmatprep.subr.mxu0 %v610
    %688 = vmatpush1.msra.mxu0 %v609
    %689 = vmatprep.subr.mxu0 %v614
    %690 = vmatpush1.msra.mxu0 %v613
    %691 = vmatprep.subr.mxu0 %v618
    %692 = vmatpush1.msra.mxu0 %v617
    %693 = vmatprep.subr.mxu0 %v622
    %694 = vmatpush1.msra.mxu0 %v621
    %695 = vmatprep.subr.mxu0 %v626
    %696 = vmatpush1.msra.mxu0 %v625
    %697 = vmatprep.subr.mxu0 %v630
    %698 = vmatpush1.msra.mxu0 %v629
    %699 = vmatprep.subr.mxu0 %v634
    %700 = vmatpush1.msra.mxu0 %v633
    %701 = vmatprep.subr.mxu0 %v638
    %702 = vmatpush1.msra.mxu0 %v637
    %703 = vmatprep.subr.mxu0 %v642
    %704 = vmatpush1.msra.mxu0 %v641
    %705 = vmatprep.subr.mxu0 %v646
    %706 = vmatpush1.msra.mxu0 %v645
    %707 = vmatprep.subr.mxu0 %v650
    %708 = vmatpush1.msra.mxu0 %v649
    %709 = vmatprep.subr.mxu0 %v654
    %710 = vmatpush1.msra.mxu0 %v653
    %711 = vmatprep.subr.mxu0 0.0
    %712 = vmatpush1.msra.mxu0 0.0
    %713 = vmatprep.subr.mxu0 0.0
    %714 = vmatpush1.msra.mxu0 0.0
    %715 = vmatprep.subr.mxu0 0.0
    %716 = vmatpush1.msra.mxu0 0.0
    %717 = vmatprep.subr.mxu0 0.0
    %718 = vmatpush1.msra.mxu0 0.0
    %719 = vmatprep.subr.mxu0 0.0
    %720 = vmatpush1.msra.mxu0 0.0
    %721 = vmatprep.subr.mxu0 0.0
    %722 = vmatpush1.msra.mxu0 0.0
    %723 = vmatprep.subr.mxu0 0.0
    %724 = vmatpush1.msra.mxu0 0.0
    %725 = vmatprep.subr.mxu0 0.0
    %726 = vmatpush1.msra.mxu0 0.0
    %727 = vmatprep.subr.mxu0 0.0
    %728 = vmatpush1.msra.mxu0 0.0
    %729 = vmatprep.subr.mxu0 0.0
    %730 = vmatpush1.msra.mxu0 0.0
    %731 = vmatprep.subr.mxu0 0.0
    %732 = vmatpush1.msra.mxu0 0.0
    %733 = vmatprep.subr.mxu0 0.0
    %734 = vmatpush1.msra.mxu0 0.0
    %735 = vmatprep.subr.mxu0 0.0
    %736 = vmatpush1.msra.mxu0 0.0
    %737 = vmatprep.subr.mxu0 0.0
    %738 = vmatpush1.msra.mxu0 0.0
    %739 = vmatprep.subr.mxu0 0.0
    %740 = vmatpush1.msra.mxu0 0.0
    %741 = vmatprep.subr.mxu0 0.0
    %742 = vmatpush1.msra.mxu0 0.0
    %743 = vmatprep.mubr.f32.mxu0 0.0
    %744 = vmatmul.mubr.f32.gmra.mrb[0].mxu0 %v592
    %v745 = vpop.f32.mrb[0].mxu0
    %v746 = vadd.f32 %v662, %v745
    %v747 = vpop.f32.mrb[0].mxu0
    %v748 = vadd.f32 %v666, %v747
    %749 = vdwg.mxu0
    %750 = vmatprep.subr.mxu0 %v596
    %751 = vmatpush1.msra.mxu0 %v595
    %752 = vmatprep.subr.mxu0 %v600
    %753 = vmatpush1.msra.mxu0 %v599
    %754 = vmatprep.subr.mxu0 %v604
    %755 = vmatpush1.msra.mxu0 %v603
    %756 = vmatprep.subr.mxu0 %v608
    %757 = vmatpush1.msra.mxu0 %v607
    %758 = vmatprep.subr.mxu0 %v612
    %759 = vmatpush1.msra.mxu0 %v611
    %760 = vmatprep.subr.mxu0 %v616
    %761 = vmatpush1.msra.mxu0 %v615
    %762 = vmatprep.subr.mxu0 %v620
    %763 = vmatpush1.msra.mxu0 %v619
    %764 = vmatprep.subr.mxu0 %v624
    %765 = vmatpush1.msra.mxu0 %v623
    %766 = vmatprep.subr.mxu0 %v628
    %767 = vmatpush1.msra.mxu0 %v627
    %768 = vmatprep.subr.mxu0 %v632
    %769 = vmatpush1.msra.mxu0 %v631
    %770 = vmatprep.subr.mxu0 %v636
    %771 = vmatpush1.msra.mxu0 %v635
    %772 = vmatprep.subr.mxu0 %v640
    %773 = vmatpush1.msra.mxu0 %v639
    %774 = vmatprep.subr.mxu0 %v644
    %775 = vmatpush1.msra.mxu0 %v643
    %776 = vmatprep.subr.mxu0 %v648
    %777 = vmatpush1.msra.mxu0 %v647
    %778 = vmatprep.subr.mxu0 %v652
    %779 = vmatpush1.msra.mxu0 %v651
    %780 = vmatprep.subr.mxu0 %v656
    %781 = vmatpush1.msra.mxu0 %v655
    %782 = vmatprep.subr.mxu0 0.0
    %783 = vmatpush1.msra.mxu0 0.0
    %784 = vmatprep.subr.mxu0 0.0
    %785 = vmatpush1.msra.mxu0 0.0
    %786 = vmatprep.subr.mxu0 0.0
    %787 = vmatpush1.msra.mxu0 0.0
    %788 = vmatprep.subr.mxu0 0.0
    %789 = vmatpush1.msra.mxu0 0.0
    %790 = vmatprep.subr.mxu0 0.0
    %791 = vmatpush1.msra.mxu0 0.0
    %792 = vmatprep.subr.mxu0 0.0
    %793 = vmatpush1.msra.mxu0 0.0
    %794 = vmatprep.subr.mxu0 0.0
    %795 = vmatpush1.msra.mxu0 0.0
    %796 = vmatprep.subr.mxu0 0.0
    %797 = vmatpush1.msra.mxu0 0.0
    %798 = vmatprep.subr.mxu0 0.0
    %799 = vmatpush1.msra.mxu0 0.0
    %800 = vmatprep.subr.mxu0 0.0
    %801 = vmatpush1.msra.mxu0 0.0
    %802 = vmatprep.subr.mxu0 0.0
    %803 = vmatpush1.msra.mxu0 0.0
    %804 = vmatprep.subr.mxu0 0.0
    %805 = vmatpush1.msra.mxu0 0.0
    %806 = vmatprep.subr.mxu0 0.0
    %807 = vmatpush1.msra.mxu0 0.0
    %808 = vmatprep.subr.mxu0 0.0
    %809 = vmatpush1.msra.mxu0 0.0
    %810 = vmatprep.subr.mxu0 0.0
    %811 = vmatpush1.msra.mxu0 0.0
    %812 = vmatprep.subr.mxu0 0.0
    %813 = vmatpush1.msra.mxu0 0.0
    %814 = vmatprep.mubr.f32.mxu0 0.0
    %815 = vmatmul.mubr.f32.gmra.mrb[0].mxu0 %v592
    %v816 = vpop.f32.mrb[0].mxu0
    %v817 = vadd.f32 %v670, %v816
    %v818 = vpop.f32.mrb[0].mxu0
    %v819 = vadd.f32 %v674, %v818
    %820 = vdwg.mxu0
    %vm821 = vcmp.gt.f32.partialorder %v746, 0.0
    %vm822 = vcmp.gt.f32.partialorder %v748, 0.0
    %vm823 = vcmp.gt.f32.partialorder %v817, 0.0
    %vm824 = vcmp.gt.f32.partialorder %v819, 0.0
    %v825 = vmin.f32 %v746, 0.0
    %v826 = vmin.f32 %v748, 0.0
    %v827 = vmin.f32 %v817, 0.0
    %v828 = vmin.f32 %v819, 0.0
    %v829 = vmul.f32 %v825, 1.442695
    %v830 = vpow.pop %v829
    %v831 = vmul.f32 %v826, 1.442695
    %v832 = vpow.pop %v831
    %v833 = vmul.f32 %v827, 1.442695
    %v834 = vpow.pop %v833
    %v835 = vmul.f32 %v828, 1.442695
    %v836 = vpow.pop %v835
    %v837 = vsub.f32 %v830, 1.0
    %v838 = vsub.f32 %v832, 1.0
    %v839 = vsub.f32 %v834, 1.0
    %v840 = vsub.f32 %v836, 1.0
    %v841 = vsel %vm821, %v746, %v837
    %v842 = vsel %vm822, %v748, %v838
    %v843 = vsel %vm823, %v817, %v839
    %v844 = vsel %vm824, %v819, %v840
    %v845 = vld [vmem:[%s10] sm:$0xff]
    %v846 = vld [vmem:[%s10 + $0x8] sm:$0xff]
    %v847 = vld [vmem:[%s10 + $0x10] sm:$0xff]
    %v848 = vld [vmem:[%s10 + $0x18] sm:$0xff]
    %v849 = vld [vmem:[%s10 + $0x20] sm:$0xff]
    %v850 = vld [vmem:[%s10 + $0x28] sm:$0xff]
    %v851 = vld [vmem:[%s10 + $0x30] sm:$0xff]
    %v852 = vld [vmem:[%s10 + $0x38] sm:$0xff]
    %v853 = vld [vmem:[%s10 + $0x40] sm:$0xff]
    %v854 = vld [vmem:[%s10 + $0x48] sm:$0xff]
    %v855 = vld [vmem:[%s10 + $0x50] sm:$0xff]
    %v856 = vld [vmem:[%s10 + $0x58] sm:$0xff]
    %v857 = vld [vmem:[%s10 + $0x60] sm:$0xff]
    %v858 = vld [vmem:[%s10 + $0x68] sm:$0xff]
    %v859 = vld [vmem:[%s10 + $0x70] sm:$0xff]
    %v860 = vld [vmem:[%s10 + $0x78] sm:$0xff]
    %v861 = vld [vmem:[%s10 + $0x80] sm:$0xff]
    %v862 = vld [vmem:[%s10 + $0x88] sm:$0xff]
    %v863 = vld [vmem:[%s10 + $0x90] sm:$0xff]
    %v864 = vld [vmem:[%s10 + $0x98] sm:$0xff]
    %v865 = vld [vmem:[%s10 + $0xa0] sm:$0xff]
    %v866 = vld [vmem:[%s10 + $0xa8] sm:$0xff]
    %v867 = vld [vmem:[%s10 + $0xb0] sm:$0xff]
    %v868 = vld [vmem:[%s10 + $0xb8] sm:$0xff]
    %v869 = vld [vmem:[%s10 + $0xc0] sm:$0xff]
    %v870 = vld [vmem:[%s10 + $0xc8] sm:$0xff]
    %v871 = vld [vmem:[%s10 + $0xd0] sm:$0xff]
    %v872 = vld [vmem:[%s10 + $0xd8] sm:$0xff]
    %v873 = vld [vmem:[%s10 + $0xe0] sm:$0xff]
    %v874 = vld [vmem:[%s10 + $0xe8] sm:$0xff]
    %v875 = vld [vmem:[%s10 + $0xf0] sm:$0xff]
    %v876 = vld [vmem:[%s10 + $0xf8] sm:$0xff]
    %v877 = vld [vmem:[%s10 + $0x100] sm:$0xff]
    %v878 = vld [vmem:[%s10 + $0x108] sm:$0xff]
    %v879 = vld [vmem:[%s10 + $0x110] sm:$0xff]
    %v880 = vld [vmem:[%s10 + $0x118] sm:$0xff]
    %v881 = vld [vmem:[%s10 + $0x120] sm:$0xff]
    %v882 = vld [vmem:[%s10 + $0x128] sm:$0xff]
    %v883 = vld [vmem:[%s10 + $0x130] sm:$0xff]
    %v884 = vld [vmem:[%s10 + $0x138] sm:$0xff]
    %v885 = vld [vmem:[%s10 + $0x140] sm:$0xff]
    %v886 = vld [vmem:[%s10 + $0x148] sm:$0xff]
    %v887 = vld [vmem:[%s10 + $0x150] sm:$0xff]
    %v888 = vld [vmem:[%s10 + $0x158] sm:$0xff]
    %v889 = vld [vmem:[%s10 + $0x160] sm:$0xff]
    %v890 = vld [vmem:[%s10 + $0x168] sm:$0xff]
    %v891 = vld [vmem:[%s10 + $0x170] sm:$0xff]
    %v892 = vld [vmem:[%s10 + $0x178] sm:$0xff]
    %v893 = vld [vmem:[%s10 + $0x180] sm:$0xff]
    %v894 = vld [vmem:[%s10 + $0x188] sm:$0xff]
    %v895 = vld [vmem:[%s10 + $0x190] sm:$0xff]
    %v896 = vld [vmem:[%s10 + $0x198] sm:$0xff]
    %v897 = vld [vmem:[%s10 + $0x1a0] sm:$0xff]
    %v898 = vld [vmem:[%s10 + $0x1a8] sm:$0xff]
    %v899 = vld [vmem:[%s10 + $0x1b0] sm:$0xff]
    %v900 = vld [vmem:[%s10 + $0x1b8] sm:$0xff]
    %v901 = vld [vmem:[%s10 + $0x1c0] sm:$0xff]
    %v902 = vld [vmem:[%s10 + $0x1c8] sm:$0xff]
    %v903 = vld [vmem:[%s10 + $0x1d0] sm:$0xff]
    %v904 = vld [vmem:[%s10 + $0x1d8] sm:$0xff]
    %v905 = vld [vmem:[%s10 + $0x1e0] sm:$0xff]
    %v906 = vld [vmem:[%s10 + $0x1e8] sm:$0xff]
    %v907 = vld [vmem:[%s10 + $0x1f0] sm:$0xff]
    %v908 = vld [vmem:[%s10 + $0x1f8] sm:$0xff]
    %v909 = vld [vmem:[#allocation2] sm:$0x1]
    %v911 = vlaneseq
    %v912 = vshrl.u32 %v911, 7
    %v913 = vsub.s32 0, %v912
    %v914 = vrot.slane %v909, %v913
    %916 = vmatprep.subr.mxu0 0.0
    %917 = vmatpush1.msra.mxu0 %v845
    %918 = vmatprep.subr.mxu0 0.0
    %919 = vmatpush1.msra.mxu0 %v846
    %920 = vmatprep.subr.mxu0 0.0
    %921 = vmatpush1.msra.mxu0 %v847
    %922 = vmatprep.subr.mxu0 0.0
    %923 = vmatpush1.msra.mxu0 %v848
    %924 = vmatprep.subr.mxu0 0.0
    %925 = vmatpush1.msra.mxu0 %v849
    %926 = vmatprep.subr.mxu0 0.0
    %927 = vmatpush1.msra.mxu0 %v850
    %928 = vmatprep.subr.mxu0 0.0
    %929 = vmatpush1.msra.mxu0 %v851
    %930 = vmatprep.subr.mxu0 0.0
    %931 = vmatpush1.msra.mxu0 %v852
    %932 = vmatprep.subr.mxu0 0.0
    %933 = vmatpush1.msra.mxu0 %v853
    %934 = vmatprep.subr.mxu0 0.0
    %935 = vmatpush1.msra.mxu0 %v854
    %936 = vmatprep.subr.mxu0 0.0
    %937 = vmatpush1.msra.mxu0 %v855
    %938 = vmatprep.subr.mxu0 0.0
    %939 = vmatpush1.msra.mxu0 %v856
    %940 = vmatprep.subr.mxu0 0.0
    %941 = vmatpush1.msra.mxu0 %v857
    %942 = vmatprep.subr.mxu0 0.0
    %943 = vmatpush1.msra.mxu0 %v858
    %944 = vmatprep.subr.mxu0 0.0
    %945 = vmatpush1.msra.mxu0 %v859
    %946 = vmatprep.subr.mxu0 0.0
    %947 = vmatpush1.msra.mxu0 %v860
    %948 = vmatprep.subr.mxu0 0.0
    %949 = vmatpush1.msra.mxu0 %v861
    %950 = vmatprep.subr.mxu0 0.0
    %951 = vmatpush1.msra.mxu0 %v862
    %952 = vmatprep.subr.mxu0 0.0
    %953 = vmatpush1.msra.mxu0 %v863
    %954 = vmatprep.subr.mxu0 0.0
    %955 = vmatpush1.msra.mxu0 %v864
    %956 = vmatprep.subr.mxu0 0.0
    %957 = vmatpush1.msra.mxu0 %v865
    %958 = vmatprep.subr.mxu0 0.0
    %959 = vmatpush1.msra.mxu0 %v866
    %960 = vmatprep.subr.mxu0 0.0
    %961 = vmatpush1.msra.mxu0 %v867
    %962 = vmatprep.subr.mxu0 0.0
    %963 = vmatpush1.msra.mxu0 %v868
    %964 = vmatprep.subr.mxu0 0.0
    %965 = vmatpush1.msra.mxu0 %v869
    %966 = vmatprep.subr.mxu0 0.0
    %967 = vmatpush1.msra.mxu0 %v870
    %968 = vmatprep.subr.mxu0 0.0
    %969 = vmatpush1.msra.mxu0 %v871
    %970 = vmatprep.subr.mxu0 0.0
    %971 = vmatpush1.msra.mxu0 %v872
    %972 = vmatprep.subr.mxu0 0.0
    %973 = vmatpush1.msra.mxu0 %v873
    %974 = vmatprep.subr.mxu0 0.0
    %975 = vmatpush1.msra.mxu0 %v874
    %976 = vmatprep.subr.mxu0 0.0
    %977 = vmatpush1.msra.mxu0 %v875
    %978 = vmatprep.subr.mxu0 0.0
    %979 = vmatpush1.msra.mxu0 %v876
    %980 = vmatprep.mubr.f32.mxu0 %v842
    %981 = vmatmul.mubr.f32.gmra.mrb[0].mxu0 %v841
    %v982 = vpop.f32.mrb[0].mxu0
    %v983 = vadd.f32 %v914, %v982
    %v984 = vpop.f32.mrb[0].mxu0
    %985 = vdwg.mxu0
    %986 = vmatprep.subr.mxu0 0.0
    %987 = vmatpush1.msra.mxu0 %v877
    %988 = vmatprep.subr.mxu0 0.0
    %989 = vmatpush1.msra.mxu0 %v878
    %990 = vmatprep.subr.mxu0 0.0
    %991 = vmatpush1.msra.mxu0 %v879
    %992 = vmatprep.subr.mxu0 0.0
    %993 = vmatpush1.msra.mxu0 %v880
    %994 = vmatprep.subr.mxu0 0.0
    %995 = vmatpush1.msra.mxu0 %v881
    %996 = vmatprep.subr.mxu0 0.0
    %997 = vmatpush1.msra.mxu0 %v882
    %998 = vmatprep.subr.mxu0 0.0
    %999 = vmatpush1.msra.mxu0 %v883
    %1000 = vmatprep.subr.mxu0 0.0
    %1001 = vmatpush1.msra.mxu0 %v884
    %1002 = vmatprep.subr.mxu0 0.0
    %1003 = vmatpush1.msra.mxu0 %v885
    %1004 = vmatprep.subr.mxu0 0.0
    %1005 = vmatpush1.msra.mxu0 %v886
    %1006 = vmatprep.subr.mxu0 0.0
    %1007 = vmatpush1.msra.mxu0 %v887
    %1008 = vmatprep.subr.mxu0 0.0
    %1009 = vmatpush1.msra.mxu0 %v888
    %1010 = vmatprep.subr.mxu0 0.0
    %1011 = vmatpush1.msra.mxu0 %v889
    %1012 = vmatprep.subr.mxu0 0.0
    %1013 = vmatpush1.msra.mxu0 %v890
    %1014 = vmatprep.subr.mxu0 0.0
    %1015 = vmatpush1.msra.mxu0 %v891
    %1016 = vmatprep.subr.mxu0 0.0
    %1017 = vmatpush1.msra.mxu0 %v892
    %1018 = vmatprep.subr.mxu0 0.0
    %1019 = vmatpush1.msra.mxu0 %v893
    %1020 = vmatprep.subr.mxu0 0.0
    %1021 = vmatpush1.msra.mxu0 %v894
    %1022 = vmatprep.subr.mxu0 0.0
    %1023 = vmatpush1.msra.mxu0 %v895
    %1024 = vmatprep.subr.mxu0 0.0
    %1025 = vmatpush1.msra.mxu0 %v896
    %1026 = vmatprep.subr.mxu0 0.0
    %1027 = vmatpush1.msra.mxu0 %v897
    %1028 = vmatprep.subr.mxu0 0.0
    %1029 = vmatpush1.msra.mxu0 %v898
    %1030 = vmatprep.subr.mxu0 0.0
    %1031 = vmatpush1.msra.mxu0 %v899
    %1032 = vmatprep.subr.mxu0 0.0
    %1033 = vmatpush1.msra.mxu0 %v900
    %1034 = vmatprep.subr.mxu0 0.0
    %1035 = vmatpush1.msra.mxu0 %v901
    %1036 = vmatprep.subr.mxu0 0.0
    %1037 = vmatpush1.msra.mxu0 %v902
    %1038 = vmatprep.subr.mxu0 0.0
    %1039 = vmatpush1.msra.mxu0 %v903
    %1040 = vmatprep.subr.mxu0 0.0
    %1041 = vmatpush1.msra.mxu0 %v904
    %1042 = vmatprep.subr.mxu0 0.0
    %1043 = vmatpush1.msra.mxu0 %v905
    %1044 = vmatprep.subr.mxu0 0.0
    %1045 = vmatpush1.msra.mxu0 %v906
    %1046 = vmatprep.subr.mxu0 0.0
    %1047 = vmatpush1.msra.mxu0 %v907
    %1048 = vmatprep.subr.mxu0 0.0
    %1049 = vmatpush1.msra.mxu0 %v908
    %1050 = vmatprep.mubr.f32.mxu0 %v844
    %1051 = vmatmul.mubr.f32.gmra.mrb[0].mxu0 %v843
    %v1052 = vpop.f32.mrb[0].mxu0
    %v1053 = vadd.f32 %v983, %v1052
    %v1054 = vpop.f32.mrb[0].mxu0
    %1055 = vdwg.mxu0
    %v1056 = vsub.f32 0.0, %v1053
    %v1057 = vmul.f32 %v1056, 1.442695
    %v1058 = vpow.pop %v1057
    %v1059 = vadd.f32 %v1058, 1.0
    %v1060 = vrcp.pop %v1059
    %v1061 = vmul.f32 1.0, %v1060
    %vm1062 = vcmask 7168
    %1063 = vst.msk [vmem:[%s12] sm:$0xff] %vm1062, %v1061
    // Predicated region
    $region58: #{tpu_custom_call.1} parent=1 // pred_check
      _
    $region59: #{tpu_custom_call.1} parent=1 // pred_check_branch
      %1065 = sbr.rel (0) target = $region61
    $region60: #{tpu_custom_call.1} parent=1 // pred_region
      _
    $region61: #{tpu_custom_call.1} parent=1 // pred_fallthru
      _
    // Predicated region
    $region62: #{tpu_custom_call.1} parent=1 // pred_check
      _
    $region63: #{tpu_custom_call.1} parent=1 // pred_check_branch
      %1067 = sbr.rel (0) target = $region65
    $region64: #{tpu_custom_call.1} parent=1 // pred_region
      %s1069 = ssub.s32 128, 128
      %1070 = vsyncadd [#allocation5], %s1069
      %s1072 = sshll.u32 [#allocation8], 4
      %s1073 = int_to_ptr.vmem [resolvable:$true] %s1072
      %1075 = dma.vmem_to_hbm [thread:$0]  %s1073, 128, %s13, [#allocation5]
    $region65: #{tpu_custom_call.1} parent=1 // pred_fallthru
      _
    // Predicated region
    $region66: #{tpu_custom_call.1} parent=1 // pred_check
      _
    $region67: #{tpu_custom_call.1} parent=1 // pred_check_branch
      %1077 = sbr.rel (0) target = $region69
    $region68: #{tpu_custom_call.1} parent=1 // pred_region
      _
    $region69: #{tpu_custom_call.1} parent=1 // pred_fallthru
      _
    // Predicated region
    $region70: #{tpu_custom_call.1} parent=1 // pred_check
      _
    $region71: #{tpu_custom_call.1} parent=1 // pred_check_branch
      %1079 = sbr.rel (0) target = $region73
    $region72: #{tpu_custom_call.1} parent=1 // pred_region
      %1080 = dma.done [#allocation5], 128
    $region73: #{tpu_custom_call.1} parent=1 // pred_fallthru
      _
    %1081 = vsyncpa [#allocation4], 1
    %1082 = vsyncpa [#allocation7], 1
    %1083 = vsyncpa [#allocation5], 1

</llo_original>
